<compile_context>
chip_gen: v5e
topology: v5e:2x2
jax: 0.10.0
libtpu: 0.0.40
codegen_flags: <defaults>
</compile_context>

<pallas_src>
import jax
import jax.numpy as jnp
from jax.experimental import pallas as pl
from jax.experimental.pallas import tpu as pltpu


def _cdiv(a: int, b: int) -> int:
    return -(-a // b)


def _padded_rows(rows: int, itemsize: int) -> int:
    """Rows after VMEM sublane-tile padding ((8,128) f32, (16,128) bf16, ...)."""
    sub = 8 * max(1, 4 // max(itemsize, 1))
    return _cdiv(rows, sub) * sub


def _default_tile_bytes() -> int:
    """Per-input, per-buffer VMEM tile budget, chosen per TPU generation."""
    try:
        kind = jax.devices()[0].device_kind.lower()
    except Exception:
        kind = ""
    if "v7" in kind:
        # 2 inputs x 2 buffers x 8 MiB = 32 MiB, safely inside v7x's 64 MiB VMEM.
        return 8 << 20
    if "v6" in kind:
        # 16 MiB of buffers (~24 MiB scoped VMEM request on a 128 MiB part).
        return 4 << 20
    # v5e (16 MiB default scoped VMEM, ~820 GB/s HBM) and unknown chips.
    return 2 << 20


def _make_wmse_kernel(bm, bn, slab, rows, cols, rows_ragged, cols_ragged):
    groups = bm // slab
    ragged = rows_ragged or cols_ragged

    def accumulate(pred_ref, tgt_ref, acc_ref, i, j, masked):
        # Walk the (bm, bn) tile in (slab, bn) sublane slabs so intermediates
        # stay vreg-group sized (no (bm, bn) f32 temp materialized in VMEM).
        for g in range(groups):            # static, fully unrolled (<= 16 slabs)
            r0 = g * slab
            rsl = pl.ds(r0, slab)
            d = (pred_ref[rsl, :].astype(jnp.float32)
                 - tgt_ref[rsl, :].astype(jnp.float32))
            if masked:
                # Edge tiles contain out-of-bounds garbage; zero it BEFORE squaring.
                rid = (jax.lax.broadcasted_iota(jnp.int32, (slab, bn), 0)
                       + i * bm + r0)
                cid = (jax.lax.broadcasted_iota(jnp.int32, (slab, bn), 1)
                       + j * bn)
                d = jnp.where(jnp.logical_and(rid < rows, cid < cols), d, 0.0)
            acc_ref[...] += d * d          # pure VPU work in the hot loop

    def kernel(pred_ref, tgt_ref, out_ref, acc_ref):
        i = pl.program_id(0)
        j = pl.program_id(1)
        ni = pl.num_programs(0)
        nj = pl.num_programs(1)

        @pl.when(jnp.logical_and(i == 0, j == 0))
        def _():
            acc_ref[...] = jnp.zeros_like(acc_ref)

        if ragged:
            conds = []
            if rows_ragged:
                conds.append(i == ni - 1)
            if cols_ragged:
                conds.append(j == nj - 1)
            is_edge = conds[0] if len(conds) == 1 else jnp.logical_or(*conds)

            @pl.when(is_edge)
            def _():
                accumulate(pred_ref, tgt_ref, acc_ref, i, j, masked=True)

            @pl.when(jnp.logical_not(is_edge))
            def _():
                accumulate(pred_ref, tgt_ref, acc_ref, i, j, masked=False)
        else:
            accumulate(pred_ref, tgt_ref, acc_ref, i, j, masked=False)

        @pl.when(jnp.logical_and(i == ni - 1, j == nj - 1))
        def _():
            # Single cross-lane (XLU) reduction, paid once for the whole grid.
            out_ref[0, 0] = jnp.sum(acc_ref[...])

    return kernel


def weighted_mse_loss(pred: jax.Array, target: jax.Array, *,
                      tile_bytes: int | None = None,
                      row_cap: int = 128) -> jax.Array:
    """Computes mean((pred - target.reshape(B, -1))**2) as a float32 scalar."""
    B = pred.shape[0]
    p2 = pred.reshape(B, -1)                 # free metadata-only reshape
    t2 = target.reshape(B, -1)               # same as torch .view(B, -1)
    assert p2.shape == t2.shape, (p2.shape, t2.shape)

    total = int(p2.size)
    rows, cols = p2.shape

    # For tiny batches (B < 8 wastes 6/8 of every VMEM sublane tile), switch to
    # a *free* flat view (R, C) whose lane width C divides the element count
    # exactly — no jnp.pad, no HBM copies, just a different window on the same
    # bytes.  Fall back to the native (B, N) view (with edge masking) otherwise.
    if rows < 8:
        best_c = 0
        c_cap = min(16384, total // 8)
        for c in range(128, c_cap + 1, 128):
            if total % c == 0:
                best_c = c
        if best_c >= 512:
            rows, cols = total // best_c, best_c
            p2 = p2.reshape(rows, cols)
            t2 = t2.reshape(rows, cols)

    ip = jnp.dtype(p2.dtype).itemsize
    it = jnp.dtype(t2.dtype).itemsize
    if tile_bytes is None:
        tile_bytes = _default_tile_bytes()

    # --- block rows: multiple of 8 sublanes (or the full dim when rows < 8) ---
    if rows < 8:
        bm = rows
    elif rows % 8 == 0:
        bm = min(rows, row_cap)
    else:
        bm = min(8 * (rows // 8), row_cap)
    rows_ragged = (rows % bm) != 0

    # --- block cols: multiple of 128 lanes (or the full dim), sized so one
    #     sublane-padded input block stays within the per-chip tile budget -----
    bytes_per_lane = max(_padded_rows(bm, ip) * ip, _padded_rows(bm, it) * it)
    target_lanes = max(128, tile_bytes // bytes_per_lane)
    bn = cols if cols <= target_lanes else 128 * (target_lanes // 128)
    cols_ragged = (cols % bn) != 0

    slab = 8 if bm % 8 == 0 else bm          # sublane-slab height of the hot loop
    grid = (_cdiv(rows, bm), _cdiv(cols, bn))

    blk_bytes = (_padded_rows(bm, ip) * bn * ip) + (_padded_rows(bm, it) * bn * it)
    acc_bytes = _padded_rows(slab, 4) * bn * 4
    vmem_limit = int(2 * blk_bytes + acc_bytes + (8 << 20))

    out = pl.pallas_call(
        _make_wmse_kernel(bm, bn, slab, rows, cols, rows_ragged, cols_ragged),
        out_shape=jax.ShapeDtypeStruct((1, 1), jnp.float32),
        grid_spec=pltpu.PrefetchScalarGridSpec(
            num_scalar_prefetch=0,
            grid=grid,
            in_specs=[
                pl.BlockSpec((bm, bn), lambda i, j: (i, j)),
                pl.BlockSpec((bm, bn), lambda i, j: (i, j)),
            ],
            out_specs=pl.BlockSpec((1, 1), lambda i, j: (0, 0),
                                   memory_space=pltpu.SMEM),
            scratch_shapes=[pltpu.VMEM((slab, bn), jnp.float32)],
        ),
        compiler_params=pltpu.CompilerParams(
            dimension_semantics=("arbitrary", "arbitrary"),
            vmem_limit_bytes=vmem_limit,
        ),
    )(p2, t2)

    # Normalize by the TRUE element count; float32 mirrors torch.FloatTensor.
    return (out[0, 0] / jnp.float32(total)).astype(jnp.float32)


if __name__ == "__main__":
    key = jax.random.PRNGKey(0)
    k1, k2, k3, k4, k5, k6 = jax.random.split(key, 6)

    # 1) Main case: pred already flattened (B, N); target arrives NCHW.
    B, C, H, W = 2, 4, 16, 16
    pred = jax.random.normal(k1, (B, C * H * W), dtype=jnp.float32)
    target = jax.random.normal(k2, (B, C, H, W), dtype=jnp.float32)
    loss = jax.block_until_ready(weighted_mse_loss(pred, target))
    ref = jnp.mean((pred - target.reshape(B, -1)) ** 2)
    assert loss.dtype == jnp.float32
    assert jnp.allclose(loss, ref, rtol=1e-5, atol=1e-6), (loss, ref)

    # 2) Small-batch flat-view path (free reshape, dense sublanes).
    B2, C2, H2, W2 = 2, 8, 32, 32
    pred2 = jax.random.normal(k3, (B2, C2 * H2 * W2), dtype=jnp.float32)
    target2 = jax.random.normal(k4, (B2, C2, H2, W2), dtype=jnp.float32)
    loss2 = jax.block_until_ready(weighted_mse_loss(pred2, target2))
    ref2 = jnp.mean((pred2 - target2.reshape(B2, -1)) ** 2)
    assert jnp.allclose(loss2, ref2, rtol=1e-5, atol=1e-6), (loss2, ref2)

    # 3) Ragged multi-block path (row & col edge masking), tiny forced tiles.
    B3, C3, H3, W3 = 10, 3, 10, 10
    pred3 = jax.random.normal(k5, (B3, C3 * H3 * W3), dtype=jnp.float32)
    target3 = jax.random.normal(k6, (B3, C3, H3, W3), dtype=jnp.float32)
    loss3 = jax.block_until_ready(weighted_mse_loss(pred3, target3, tile_bytes=8192))
    ref3 = jnp.mean((pred3 - target3.reshape(B3, -1)) ** 2)
    assert jnp.allclose(loss3, ref3, rtol=1e-5, atol=1e-6), (loss3, ref3)

    print("KERNEL_OK")
</pallas_src>

<mosaic_0001>
module attributes {stable_mosaic.version = 11 : i64} {
  func.func @kernel(%arg0: i32, %arg1: i32, %arg2: memref<2x1024xf32, #tpu.memory_space<vmem>>, %arg3: memref<2x1024xf32, #tpu.memory_space<vmem>>, %arg4: memref<1x1xf32, #tpu.memory_space<smem>>, %arg5: memref<2x1024xf32, #tpu.memory_space<vmem>>) attributes {dimension_semantics = [#tpu.dimension_semantics<arbitrary>, #tpu.dimension_semantics<arbitrary>], iteration_bounds = array<i64: 1, 1>, scalar_prefetch = 0 : i64, scratch_operands = 1 : i64, tpu.core_type = #tpu.core_type<tc>, window_params = [{transform_indices = @transform_0, window_bounds = array<i64: 2, 1024>}, {transform_indices = @transform_1, window_bounds = array<i64: 2, 1024>}, {transform_indices = @transform_2, window_bounds = array<i64: 1, 1>}]} {
    %c0_i32 = arith.constant 0 : i32
    %0 = arith.cmpi eq, %arg0, %c0_i32 : i32
    %c0_i32_0 = arith.constant 0 : i32
    %1 = arith.cmpi eq, %arg1, %c0_i32_0 : i32
    %2 = arith.andi %0, %1 : i1
    %3 = arith.extui %2 : i1 to i32
    %c0_i32_1 = arith.constant 0 : i32
    %4 = arith.cmpi ne, %3, %c0_i32_1 : i32
    scf.if %4 {
      %cst = arith.constant 0.000000e+00 : f32
      %17 = vector.broadcast %cst : f32 to vector<2x1024xf32>
      %c0_12 = arith.constant 0 : index
      %c0_13 = arith.constant 0 : index
      %18 = vector.load %arg5[%c0_12, %c0_13] : memref<2x1024xf32, #tpu.memory_space<vmem>>, vector<2x1024xf32>
      tpu.vector_store %arg5[%c0_12, %c0_13], %17 {strides = array<i32>} : memref<2x1024xf32, #tpu.memory_space<vmem>>, vector<2x1024xf32>,
    } else {
    }
    %c0 = arith.constant 0 : index
    %c0_2 = arith.constant 0 : index
    %5 = vector.load %arg2[%c0, %c0_2] : memref<2x1024xf32, #tpu.memory_space<vmem>>, vector<2x1024xf32>
    %c0_3 = arith.constant 0 : index
    %c0_4 = arith.constant 0 : index
    %6 = vector.load %arg3[%c0_3, %c0_4] : memref<2x1024xf32, #tpu.memory_space<vmem>>, vector<2x1024xf32>
    %7 = arith.subf %5, %6 : vector<2x1024xf32>
    %c0_5 = arith.constant 0 : index
    %c0_6 = arith.constant 0 : index
    %8 = vector.load %arg5[%c0_5, %c0_6] : memref<2x1024xf32, #tpu.memory_space<vmem>>, vector<2x1024xf32>
    %9 = arith.mulf %7, %7 : vector<2x1024xf32>
    %10 = arith.addf %8, %9 : vector<2x1024xf32>
    %c0_7 = arith.constant 0 : index
    %c0_8 = arith.constant 0 : index
    %11 = vector.load %arg5[%c0_7, %c0_8] : memref<2x1024xf32, #tpu.memory_space<vmem>>, vector<2x1024xf32>
    tpu.vector_store %arg5[%c0_7, %c0_8], %10 {strides = array<i32>} : memref<2x1024xf32, #tpu.memory_space<vmem>>, vector<2x1024xf32>,
    %c0_i32_9 = arith.constant 0 : i32
    %12 = arith.cmpi eq, %arg0, %c0_i32_9 : i32
    %c0_i32_10 = arith.constant 0 : i32
    %13 = arith.cmpi eq, %arg1, %c0_i32_10 : i32
    %14 = arith.andi %12, %13 : i1
    %15 = arith.extui %14 : i1 to i32
    %c0_i32_11 = arith.constant 0 : i32
    %16 = arith.cmpi ne, %15, %c0_i32_11 : i32
    scf.if %16 {
      %c0_12 = arith.constant 0 : index
      %c0_13 = arith.constant 0 : index
      %17 = vector.load %arg5[%c0_12, %c0_13] : memref<2x1024xf32, #tpu.memory_space<vmem>>, vector<2x1024xf32>
      %18 = vector.shape_cast %17 : vector<2x1024xf32> to vector<1x2x1024xf32>
      %cst = arith.constant dense<0.000000e+00> : vector<1xf32>
      %19 = vector.multi_reduction <add>, %18, %cst [1, 2] : vector<1x2x1024xf32> to vector<1xf32>
      %20 = vector.shape_cast %19 : vector<1xf32> to vector<1x1x1xf32>
      %21 = vector.extract %20[0, 0, 0] : f32 from vector<1x1x1xf32>
      %c0_14 = arith.constant 0 : index
      %c0_15 = arith.constant 0 : index
      %22 = memref.load %arg4[%c0_14, %c0_15] : memref<1x1xf32, #tpu.memory_space<smem>>
      memref.store %21, %arg4[%c0_14, %c0_15] : memref<1x1xf32, #tpu.memory_space<smem>>
    } else {
    }
    return
  }
  func.func @transform_0(%arg0: i32, %arg1: i32) -> (i32, i32) {
    %c0_i32 = arith.constant 0 : i32
    return %arg0, %arg1 : i32, i32
  }
  func.func @transform_1(%arg0: i32, %arg1: i32) -> (i32, i32) {
    %c0_i32 = arith.constant 0 : i32
    return %arg0, %arg1 : i32, i32
  }
  func.func @transform_2(%arg0: i32, %arg1: i32) -> (i32, i32) {
    %c0_i32 = arith.constant 0 : i32
    %c0_i32_0 = arith.constant 0 : i32
    %c0_i32_1 = arith.constant 0 : i32
    return %c0_i32, %c0_i32_0 : i32, i32
  }
}

</mosaic_0001>

<llo_original>
// kernel: tpu_custom_call.1
$region0: #{tpu_custom_call.1}
  #allocation0 [shape = 'u32[]', space=smem, size = 0x4, offset = 0x4, fixed_abs, tag = 'smem constant byte address 0x4 - core index']
  #allocation1 [shape = 'u32[72,128]{1,0:T(1,128)}', space=vmem, size = 0x9000, scoped, tag = 'internal scratch']
  #allocation2 [shape = 'f32[2,1024]{1,0:T(2,128)}', space=vmem, size = 0x2000, scoped, tag = 'scratch operand']
  %s0 = inlined_call_operand.hbm [shape: f32[2,1024], index: 0, kind: input, shape index: {}]
  %s1 = inlined_call_operand.hbm [shape: f32[2,1024], index: 1, kind: input, shape index: {}]
  %s2 = inlined_call_operand.hbm [shape: f32[1,1], index: 2, kind: output, shape index: {}]
  %s3 = sld [smem:[#allocation0]]
  $region34: #{tpu_custom_call.1} parent=0
    _
  %s5 = ssub.s32 1, %s3
  %s6 = scalar_select 0, %s5, %s3
  $region1: #{tpu_custom_call.1} parent=0
    #allocation3 [shape = 'u8[8192]{0}', space=vmem, size = 0x2000, scoped, tag = 'input window, operand 0, single buffered']
    #allocation4 [shape = 's32[1]{0}', space=sflag, size = 0x4, scoped, tag = 'scoped memory for tpu_custom_call.1']
    #allocation5 [shape = 's32[1]{0}', space=sflag, size = 0x4, scoped, tag = 'scoped memory for tpu_custom_call.1']
    #allocation6 [shape = 'u8[8192]{0}', space=vmem, size = 0x2000, scoped, tag = 'input window, operand 1, single buffered']
    #allocation7 [shape = 's32[1]{0}', space=sflag, size = 0x4, scoped, tag = 'scoped memory for tpu_custom_call.1']
    #allocation8 [shape = 'u8[512]{0}', space=smem, size = 0x200, scoped, tag = 'output window, operand 0, single buffered']
    %7 = vsyncpa [#allocation4], 0
    %8 = vsyncpa [#allocation7], 0
    %9 = vsyncpa [#allocation5], 0
    // Predicated region
    $region2: #{tpu_custom_call.1} parent=1 // pred_check
      _
    $region3: #{tpu_custom_call.1} parent=1 // pred_check_branch
      %11 = sbr.rel (0) target = $region5
    $region4: #{tpu_custom_call.1} parent=1 // pred_region
      %13 = vsyncadd [#allocation4], 0
      %s15 = sshll.u32 %s0, 4
      %s16 = int_to_ptr.hbm [resolvable:$true] %s15
      %s17 = sshll.u32 [#allocation3], 4
      %s18 = int_to_ptr.vmem [resolvable:$true] %s17
      %20 = dma.hbm_to_vmem [thread:$0]  %s16, 256, %s18, [#allocation4]
    $region5: #{tpu_custom_call.1} parent=1 // pred_fallthru
      _
    // Predicated region
    $region6: #{tpu_custom_call.1} parent=1 // pred_check
      _
    $region7: #{tpu_custom_call.1} parent=1 // pred_check_branch
      %22 = sbr.rel (0) target = $region9
    $region8: #{tpu_custom_call.1} parent=1 // pred_region
      %24 = vsyncadd [#allocation7], 0
      %s26 = sshll.u32 %s1, 4
      %s27 = int_to_ptr.hbm [resolvable:$true] %s26
      %s28 = sshll.u32 [#allocation6], 4
      %s29 = int_to_ptr.vmem [resolvable:$true] %s28
      %31 = dma.hbm_to_vmem [thread:$0]  %s27, 256, %s29, [#allocation7]
    $region9: #{tpu_custom_call.1} parent=1 // pred_fallthru
      _
    // Predicated region
    $region10: #{tpu_custom_call.1} parent=1 // pred_check
      _
    $region11: #{tpu_custom_call.1} parent=1 // pred_check_branch
      %33 = sbr.rel (0) target = $region13
    $region12: #{tpu_custom_call.1} parent=1 // pred_region
      %35 = dma.done [#allocation4], 256
    $region13: #{tpu_custom_call.1} parent=1 // pred_fallthru
      _
    // Predicated region
    $region14: #{tpu_custom_call.1} parent=1 // pred_check
      _
    $region15: #{tpu_custom_call.1} parent=1 // pred_check_branch
      %37 = sbr.rel (0) target = $region17
    $region16: #{tpu_custom_call.1} parent=1 // pred_region
      %39 = dma.done [#allocation7], 256
    $region17: #{tpu_custom_call.1} parent=1 // pred_fallthru
      _
    %p40 = scmp.eq.s32.totalorder 0, 0
    %p41 = scmp.eq.s32.totalorder 0, 0
    %p42 = pnand %p40, %p41
    %p43 = pneg %p42
    // Predicated region
    $region18: #{tpu_custom_call.1} parent=1 // pred_check
      _
    $region19: #{tpu_custom_call.1} parent=1 // pred_check_branch
      %45 = sbr.rel (%p42) target = $region21
    $region20: #{tpu_custom_call.1} parent=1 // pred_region
      %46 = vst [vmem:[#allocation2] sm:$0xff] 0.0
      %47 = vst [vmem:[#allocation2 + $0x8] sm:$0xff] 0.0
    $region21: #{tpu_custom_call.1} parent=1 // pred_fallthru
      _
    %v48 = vld [vmem:[#allocation3] sm:$0xff]
    %v49 = vld [vmem:[#allocation3 + $0x8] sm:$0xff]
    %v50 = vld [vmem:[#allocation6] sm:$0xff]
    %v51 = vld [vmem:[#allocation6 + $0x8] sm:$0xff]
    %v52 = vsub.f32 %v48, %v50
    %v53 = vsub.f32 %v49, %v51
    %v54 = vld [vmem:[#allocation2] sm:$0xff]
    %v55 = vld [vmem:[#allocation2 + $0x8] sm:$0xff]
    %v56 = vmul.f32 %v52, %v52
    %v57 = vmul.f32 %v53, %v53
    %v58 = vadd.f32 %v54, %v56
    %v59 = vadd.f32 %v55, %v57
    %60 = vst [vmem:[#allocation2] sm:$0xff] %v58
    %61 = vst [vmem:[#allocation2 + $0x8] sm:$0xff] %v59
    // Predicated region
    $region22: #{tpu_custom_call.1} parent=1 // pred_check
      _
    $region23: #{tpu_custom_call.1} parent=1 // pred_check_branch
      %63 = sbr.rel (%p42) target = $region25
    $region24: #{tpu_custom_call.1} parent=1 // pred_region
      %v64 = vld [vmem:[#allocation2] sm:$0xff]
      %v65 = vld [vmem:[#allocation2 + $0x8] sm:$0xff]
      %68 = vst [vmem:[#allocation1] ss:$4 sm:$0xff] %v64
      %s69 = scalar_lea.vmem [#allocation1], 32
      %70 = vst [vmem:[%s69] ss:$4 sm:$0xff] %v65
      %v71 = vld.sshfl [vmem:[#allocation1] sm:$0xff pattern:$0x73625140]
      %v72 = vld.sshfl [vmem:[#allocation1 + $0x8] sm:$0xff pattern:$0x73625140]
      %v73 = vld.sshfl [vmem:[#allocation1 + $0x10] sm:$0xff pattern:$0x73625140]
      %v74 = vld.sshfl [vmem:[#allocation1 + $0x18] sm:$0xff pattern:$0x73625140]
      %v75 = vld.sshfl [vmem:[#allocation1 + $0x20] sm:$0xff pattern:$0x73625140]
      %v76 = vld.sshfl [vmem:[#allocation1 + $0x28] sm:$0xff pattern:$0x73625140]
      %v77 = vld.sshfl [vmem:[#allocation1 + $0x30] sm:$0xff pattern:$0x73625140]
      %v78 = vld.sshfl [vmem:[#allocation1 + $0x38] sm:$0xff pattern:$0x73625140]
      %vm87 = vcmask 1041408
      %v88 = vsel %vm87, %v71, 0.0
      %v89 = vsel %vm87, %v72, 0.0
      %v90 = vadd.f32 %v88, %v89
      %v91 = vsel %vm87, %v73, 0.0
      %v92 = vadd.f32 %v90, %v91
      %v93 = vsel %vm87, %v74, 0.0
      %v94 = vadd.f32 %v92, %v93
      %v95 = vsel %vm87, %v75, 0.0
      %v96 = vadd.f32 %v94, %v95
      %v97 = vsel %vm87, %v76, 0.0
      %v98 = vadd.f32 %v96, %v97
      %v99 = vsel %vm87, %v77, 0.0
      %v100 = vadd.f32 %v98, %v99
      %v101 = vsel %vm87, %v78, 0.0
      %v102 = vadd.f32 %v100, %v101
      %103 = vadd.xlane.f32.xlu0 %v102
      %v104 = vpop.xlane.xlu0 %103
      %v105 = vrot.slane %v104, 4
      %v106 = vadd.f32 %v104, %v105
      %v107 = vrot.slane %v106, 2
      %v108 = vadd.f32 %v106, %v107
      %v109 = vrot.slane %v108, 1
      %v110 = vadd.f32 %v108, %v109
      %s111 = vtos %v110
      %s112 = scalar_lea.smem [#allocation8], 0
      %113 = sst [smem:[%s112]] %s111
    $region25: #{tpu_custom_call.1} parent=1 // pred_fallthru
      _
    // Predicated region
    $region26: #{tpu_custom_call.1} parent=1 // pred_check
      _
    $region27: #{tpu_custom_call.1} parent=1 // pred_check_branch
      %115 = sbr.rel (0) target = $region29
    $region28: #{tpu_custom_call.1} parent=1 // pred_region
      %117 = vsyncadd [#allocation5], 0
      %s119 = sshll.u32 %s2, 4
      %s120 = int_to_ptr.hbm [resolvable:$true] %s119
      %122 = dma.smem_to_hbm [#allocation8], 16, %s120, [#allocation5]
    $region29: #{tpu_custom_call.1} parent=1 // pred_fallthru
      _
    // Predicated region
    $region30: #{tpu_custom_call.1} parent=1 // pred_check
      _
    $region31: #{tpu_custom_call.1} parent=1 // pred_check_branch
      %124 = sbr.rel (0) target = $region33
    $region32: #{tpu_custom_call.1} parent=1 // pred_region
      %126 = dma.done [#allocation5], 16
    $region33: #{tpu_custom_call.1} parent=1 // pred_fallthru
      _
    %127 = sfence
    %128 = vsyncpa [#allocation4], 1
    %129 = vsyncpa [#allocation7], 1
    %130 = vsyncpa [#allocation5], 1

</llo_original>
